<compile_context>
chip_gen: v7x
topology: tpu7x:2x2x1
jax: 0.10.0
libtpu: 0.0.40
codegen_flags: <defaults>
</compile_context>

<pallas_src>
import functools

import jax
import jax.numpy as jnp
from jax.experimental import pallas as pl
from jax.experimental.pallas import tpu as pltpu


def _dice_partial_kernel(x_ref, t_ref, inter_ref, denom_ref, *,
                         beta2, f, tile_f, cps, needs_mask):
    """Grid = (split, chunk). Accumulates per-sample partial sums into the
    resident (1, num, 1) output blocks of the current split."""
    s = pl.program_id(0)
    k = pl.program_id(1)

    @pl.when(k == 0)
    def _():
        inter_ref[...] = jnp.zeros_like(inter_ref)
        denom_ref[...] = jnp.zeros_like(denom_ref)

    x = x_ref[...].astype(jnp.float32)
    t = t_ref[...].astype(jnp.float32)

    if needs_mask:
        # Zero out lanes past the true feature length (tail block, and any
        # duplicated fully-out-of-range chunk slot of the last split).
        start = (s * cps + k) * tile_f
        col = jax.lax.broadcasted_iota(jnp.int32, x.shape, 1)
        keep = (col + start) < f
        x = jnp.where(keep, x, 0.0)
        t = jnp.where(keep, t, 0.0)

    inter_ref[...] += jnp.sum(x * t, axis=1, keepdims=True)[None]
    denom_ref[...] += jnp.sum(x + beta2 * t, axis=1, keepdims=True)[None]


def _choose_tile_f(num, f, itemsize, target_block_bytes=4 << 20,
                   max_block_bytes=6 << 20):
    """Lane-aligned feature tile sized for ~4 MiB per input block."""
    row_bytes = max(1, num * itemsize)
    tile = (target_block_bytes // row_bytes) // 128 * 128
    tile_cap = max(128, (max_block_bytes // row_bytes) // 128 * 128)
    tile = max(128, min(tile, tile_cap))
    if tile >= f:
        return int(f)          # single full-width block (always layout-legal)
    return int(tile)


def dice_loss(x, target, *, beta=0.5, with_bce=None, tile_f=None, nsplit=None):
    """Pallas implementation of DiceLoss.forward (with_bce=None path)."""
    # TODO(synk): with_bce (binary_cross_entropy_with_logits term) not implemented.
    assert with_bce is None

    num = x.shape[0]
    x2 = x.reshape(num, -1)
    t2 = target.reshape(num, -1)
    f = x2.shape[1]
    itemsize = max(x2.dtype.itemsize, t2.dtype.itemsize)

    if tile_f is None:
        tile_f = _choose_tile_f(num, f, itemsize)
    assert tile_f == f or tile_f % 128 == 0, (
        "tile_f must be a multiple of 128 (or equal the feature length)")

    n_chunks = -(-f // tile_f)                       # ceil div
    if nsplit is None:
        nsplit = 2 if n_chunks >= 2 else 1           # engage both TCs on v7x
    nsplit = max(1, min(int(nsplit), n_chunks))
    cps = -(-n_chunks // nsplit)                     # chunks per split
    needs_mask = (f % tile_f != 0) or (nsplit * cps != n_chunks)

    if nsplit * cps > n_chunks:
        # Last split has trailing chunk slots past the real data: clamp the
        # block index (the data re-read there is fully masked in the kernel).
        def feat_idx(s, k):
            return jnp.minimum(s * cps + k, n_chunks - 1)
    else:
        def feat_idx(s, k):
            return s * cps + k

    kernel = functools.partial(
        _dice_partial_kernel,
        beta2=float(beta) ** 2, f=f, tile_f=tile_f, cps=cps,
        needs_mask=needs_mask)

    block_bytes = num * tile_f * itemsize
    vmem_limit = int(min(48 << 20, max(32 << 20, 4 * block_bytes + (4 << 20))))

    inter_parts, denom_parts = pl.pallas_call(
        kernel,
        out_shape=(jax.ShapeDtypeStruct((nsplit, num, 1), jnp.float32),
                   jax.ShapeDtypeStruct((nsplit, num, 1), jnp.float32)),
        grid_spec=pltpu.PrefetchScalarGridSpec(
            num_scalar_prefetch=0,
            grid=(nsplit, cps),
            in_specs=[
                pl.BlockSpec((num, tile_f), lambda s, k: (0, feat_idx(s, k))),
                pl.BlockSpec((num, tile_f), lambda s, k: (0, feat_idx(s, k))),
            ],
            out_specs=[
                pl.BlockSpec((1, num, 1), lambda s, k: (s, 0, 0)),
                pl.BlockSpec((1, num, 1), lambda s, k: (s, 0, 0)),
            ],
        ),
        compiler_params=pltpu.CompilerParams(
            dimension_semantics=("parallel", "arbitrary"),
            vmem_limit_bytes=vmem_limit,
        ),
    )(x2, t2)

    # Tiny final combine (nsplit * num scalars) in plain JAX.
    inter = jnp.sum(inter_parts, axis=(0, 2))
    denom = jnp.sum(denom_parts, axis=(0, 2))
    smooth = 1e-05
    beta2 = float(beta) ** 2
    dice = ((1.0 + beta2) * inter + smooth) / (denom + smooth)
    return 1.0 - jnp.sum(dice) / num


def dice_loss_ref(x, target, *, beta=0.5):
    """Pure-JAX reference mirroring the PyTorch forward."""
    smooth = 1e-05
    num = x.shape[0]
    xi = x.reshape(num, -1).astype(jnp.float32)
    ti = target.reshape(num, -1).astype(jnp.float32)
    inter = (xi * ti).sum(1)
    dice = ((1 + beta ** 2) * inter + smooth) / (
        beta ** 2 * ti.sum(1) + xi.sum(1) + smooth
    )
    return 1.0 - dice.sum() / num


if __name__ == "__main__":
    key = jax.random.PRNGKey(0)
    k1, k2, k3, k4 = jax.random.split(key, 4)

    # NCHW inputs, consistent with the PyTorch module's typical use.
    x = jax.random.uniform(k1, (2, 4, 16, 16), dtype=jnp.float32)           # probabilities
    t = (jax.random.uniform(k2, (2, 4, 16, 16)) > 0.5).astype(jnp.float32)  # binary targets

    # Default (auto tile, single block here).
    out = dice_loss(x, t)
    out = jax.block_until_ready(out)
    ref = dice_loss_ref(x, t)
    assert jnp.allclose(out, ref, atol=1e-5, rtol=1e-5), (out, ref)

    # Multi-chunk + two-way parallel split (exercise the accumulation path).
    out2 = jax.block_until_ready(dice_loss(x, t, tile_f=256))
    assert jnp.allclose(out2, ref, atol=1e-5, rtol=1e-5), (out2, ref)

    # Uneven chunk count -> clamped index_map + masked tail.
    out3 = jax.block_until_ready(dice_loss(x, t, tile_f=384))
    assert jnp.allclose(out3, ref, atol=1e-5, rtol=1e-5), (out3, ref)

    # Feature length not a multiple of 128 -> masked tail block (no pad needed).
    x_odd = jax.random.uniform(k3, (3, 5, 7, 11), dtype=jnp.float32)
    t_odd = (jax.random.uniform(k4, (3, 5, 7, 11)) > 0.5).astype(jnp.float32)
    ref_odd = dice_loss_ref(x_odd, t_odd)
    out4 = jax.block_until_ready(dice_loss(x_odd, t_odd, tile_f=128))
    assert jnp.allclose(out4, ref_odd, atol=1e-5, rtol=1e-5), (out4, ref_odd)

    print("KERNEL_OK")
</pallas_src>

<mosaic_0001>
module attributes {stable_mosaic.version = 11 : i64} {
  func.func @_dice_partial_kernel(%arg0: i32, %arg1: i32, %arg2: memref<2x1024xf32, #tpu.memory_space<vmem>>, %arg3: memref<2x1024xf32, #tpu.memory_space<vmem>>, %arg4: memref<1x2x1xf32, #tpu.memory_space<vmem>>, %arg5: memref<1x2x1xf32, #tpu.memory_space<vmem>>) attributes {dimension_semantics = [#tpu.dimension_semantics<parallel>, #tpu.dimension_semantics<arbitrary>], iteration_bounds = array<i64: 1, 1>, scalar_prefetch = 0 : i64, scratch_operands = 0 : i64, tpu.core_type = #tpu.core_type<tc>, window_params = [{transform_indices = @transform_0, window_bounds = array<i64: 2, 1024>}, {transform_indices = @transform_1, window_bounds = array<i64: 2, 1024>}, {transform_indices = @transform_2, window_bounds = array<i64: 1, 2, 1>}, {transform_indices = @transform_3, window_bounds = array<i64: 1, 2, 1>}]} {
    %c0_i32 = arith.constant 0 : i32
    %0 = arith.cmpi eq, %arg1, %c0_i32 : i32
    %1 = arith.extui %0 : i1 to i32
    %c0_i32_0 = arith.constant 0 : i32
    %2 = arith.cmpi ne, %1, %c0_i32_0 : i32
    scf.if %2 {
      %cst_18 = arith.constant 0.000000e+00 : f32
      %21 = vector.broadcast %cst_18 : f32 to vector<1x2x1xf32>
      %c0_19 = arith.constant 0 : index
      %c0_20 = arith.constant 0 : index
      %c0_21 = arith.constant 0 : index
      %22 = vector.load %arg4[%c0_19, %c0_20, %c0_21] : memref<1x2x1xf32, #tpu.memory_space<vmem>>, vector<1x2x1xf32>
      tpu.vector_store %arg4[%c0_19, %c0_20, %c0_21], %21 {strides = array<i32>} : memref<1x2x1xf32, #tpu.memory_space<vmem>>, vector<1x2x1xf32>,
      %cst_22 = arith.constant 0.000000e+00 : f32
      %23 = vector.broadcast %cst_22 : f32 to vector<1x2x1xf32>
      %c0_23 = arith.constant 0 : index
      %c0_24 = arith.constant 0 : index
      %c0_25 = arith.constant 0 : index
      %24 = vector.load %arg5[%c0_23, %c0_24, %c0_25] : memref<1x2x1xf32, #tpu.memory_space<vmem>>, vector<1x2x1xf32>
      tpu.vector_store %arg5[%c0_23, %c0_24, %c0_25], %23 {strides = array<i32>} : memref<1x2x1xf32, #tpu.memory_space<vmem>>, vector<1x2x1xf32>,
    } else {
    }
    %c0 = arith.constant 0 : index
    %c0_1 = arith.constant 0 : index
    %3 = vector.load %arg2[%c0, %c0_1] : memref<2x1024xf32, #tpu.memory_space<vmem>>, vector<2x1024xf32>
    %c0_2 = arith.constant 0 : index
    %c0_3 = arith.constant 0 : index
    %4 = vector.load %arg3[%c0_2, %c0_3] : memref<2x1024xf32, #tpu.memory_space<vmem>>, vector<2x1024xf32>
    %c0_4 = arith.constant 0 : index
    %c0_5 = arith.constant 0 : index
    %c0_6 = arith.constant 0 : index
    %5 = vector.load %arg4[%c0_4, %c0_5, %c0_6] : memref<1x2x1xf32, #tpu.memory_space<vmem>>, vector<1x2x1xf32>
    %6 = arith.mulf %3, %4 : vector<2x1024xf32>
    %cst = arith.constant dense<0.000000e+00> : vector<2xf32>
    %7 = vector.multi_reduction <add>, %6, %cst [1] : vector<2x1024xf32> to vector<2xf32>
    %8 = vector.shape_cast %7 : vector<2xf32> to vector<2x1xf32>
    %9 = vector.shape_cast %8 : vector<2x1xf32> to vector<1x2x1xf32>
    %10 = arith.addf %5, %9 : vector<1x2x1xf32>
    %c0_7 = arith.constant 0 : index
    %c0_8 = arith.constant 0 : index
    %c0_9 = arith.constant 0 : index
    %11 = vector.load %arg4[%c0_7, %c0_8, %c0_9] : memref<1x2x1xf32, #tpu.memory_space<vmem>>, vector<1x2x1xf32>
    tpu.vector_store %arg4[%c0_7, %c0_8, %c0_9], %10 {strides = array<i32>} : memref<1x2x1xf32, #tpu.memory_space<vmem>>, vector<1x2x1xf32>,
    %c0_10 = arith.constant 0 : index
    %c0_11 = arith.constant 0 : index
    %c0_12 = arith.constant 0 : index
    %12 = vector.load %arg5[%c0_10, %c0_11, %c0_12] : memref<1x2x1xf32, #tpu.memory_space<vmem>>, vector<1x2x1xf32>
    %cst_13 = arith.constant 2.500000e-01 : f32
    %13 = vector.broadcast %cst_13 : f32 to vector<2x1024xf32>
    %14 = arith.mulf %13, %4 : vector<2x1024xf32>
    %15 = arith.addf %3, %14 : vector<2x1024xf32>
    %cst_14 = arith.constant dense<0.000000e+00> : vector<2xf32>
    %16 = vector.multi_reduction <add>, %15, %cst_14 [1] : vector<2x1024xf32> to vector<2xf32>
    %17 = vector.shape_cast %16 : vector<2xf32> to vector<2x1xf32>
    %18 = vector.shape_cast %17 : vector<2x1xf32> to vector<1x2x1xf32>
    %19 = arith.addf %12, %18 : vector<1x2x1xf32>
    %c0_15 = arith.constant 0 : index
    %c0_16 = arith.constant 0 : index
    %c0_17 = arith.constant 0 : index
    %20 = vector.load %arg5[%c0_15, %c0_16, %c0_17] : memref<1x2x1xf32, #tpu.memory_space<vmem>>, vector<1x2x1xf32>
    tpu.vector_store %arg5[%c0_15, %c0_16, %c0_17], %19 {strides = array<i32>} : memref<1x2x1xf32, #tpu.memory_space<vmem>>, vector<1x2x1xf32>,
    return
  }
  func.func @transform_0(%arg0: i32, %arg1: i32) -> (i32, i32) {
    %c1_i32 = arith.constant 1 : i32
    %0 = arith.muli %arg0, %c1_i32 : i32
    %1 = arith.addi %0, %arg1 : i32
    %c0_i32 = arith.constant 0 : i32
    %c0_i32_0 = arith.constant 0 : i32
    return %c0_i32, %1 : i32, i32
  }
  func.func @transform_1(%arg0: i32, %arg1: i32) -> (i32, i32) {
    %c1_i32 = arith.constant 1 : i32
    %0 = arith.muli %arg0, %c1_i32 : i32
    %1 = arith.addi %0, %arg1 : i32
    %c0_i32 = arith.constant 0 : i32
    %c0_i32_0 = arith.constant 0 : i32
    return %c0_i32, %1 : i32, i32
  }
  func.func @transform_2(%arg0: i32, %arg1: i32) -> (i32, i32, i32) {
    %c0_i32 = arith.constant 0 : i32
    %c0_i32_0 = arith.constant 0 : i32
    %c0_i32_1 = arith.constant 0 : i32
    return %arg0, %c0_i32, %c0_i32_0 : i32, i32, i32
  }
  func.func @transform_3(%arg0: i32, %arg1: i32) -> (i32, i32, i32) {
    %c0_i32 = arith.constant 0 : i32
    %c0_i32_0 = arith.constant 0 : i32
    %c0_i32_1 = arith.constant 0 : i32
    return %arg0, %c0_i32, %c0_i32_0 : i32, i32, i32
  }
}

</mosaic_0001>

<llo_original>
// kernel: tpu_custom_call.1
$region0: #{tpu_custom_call.1}
  #allocation0 [shape = 'u32[]', space=smem, size = 0x4, offset = 0x4, fixed_abs, tag = 'smem constant byte address 0x4 - core index']
  #allocation1 [shape = 'u32[144,128]{1,0:T(1,128)}', space=vmem, size = 0x12000, scoped, tag = 'internal scratch']
  %s0 = inlined_call_operand.hbm [shape: f32[2,1024], index: 0, kind: input, shape index: {}]
  %s1 = inlined_call_operand.hbm [shape: f32[2,1024], index: 1, kind: input, shape index: {}]
  %s2 = inlined_call_operand.vmem [shape: f32[1,2,1], index: 2, kind: output, shape index: {0}]
  %s3 = inlined_call_operand.vmem [shape: f32[1,2,1], index: 3, kind: output, shape index: {1}]
  %4 = xla_tuple %s2, %s3
  %s5 = sld [smem:[#allocation0]]
  $region38: #{tpu_custom_call.1} parent=0
    _
  %s7 = ssub.s32 1, %s5
  %s8 = scalar_select 0, %s7, %s5
  $region1: #{tpu_custom_call.1} parent=0
    #allocation2 [shape = 'u8[8192]{0}', space=vmem, size = 0x2000, scoped, tag = 'input window, operand 0, single buffered']
    #allocation3 [shape = 's32[1]{0}', space=sflag, size = 0x4, scoped, tag = 'scoped memory for tpu_custom_call.1']
    #allocation4 [shape = 'u8[8192]{0}', space=vmem, size = 0x2000, scoped, tag = 'input window, operand 1, single buffered']
    #allocation5 [shape = 's32[1]{0}', space=sflag, size = 0x4, scoped, tag = 'scoped memory for tpu_custom_call.1']
    %9 = vsyncpa [#allocation3], 0
    %10 = vsyncpa [#allocation5], 0
    // Predicated region
    $region2: #{tpu_custom_call.1} parent=1 // pred_check
      _
    $region3: #{tpu_custom_call.1} parent=1 // pred_check_branch
      %12 = sbr.rel (0) target = $region5
    $region4: #{tpu_custom_call.1} parent=1 // pred_region
      %s13 = sadd.s32 0, 0
      %s14 = smul.u32 8, %s13
      %s16 = ssub.s32 256, 256
      %17 = vsyncadd [#allocation3], %s16
      %s18 = smul.addr %s14, 32
      %s19 = scalar_lea.hbm %s0, %s18
      %s21 = sshll.u32 [#allocation2], 4
      %s22 = int_to_ptr.vmem [resolvable:$true] %s21
      %24 = dma.hbm_to_vmem [thread:$0]  %s19, 256, %s22, [#allocation3]
    $region5: #{tpu_custom_call.1} parent=1 // pred_fallthru
      _
    // Predicated region
    $region6: #{tpu_custom_call.1} parent=1 // pred_check
      _
    $region7: #{tpu_custom_call.1} parent=1 // pred_check_branch
      %26 = sbr.rel (0) target = $region9
    $region8: #{tpu_custom_call.1} parent=1 // pred_region
      %s27 = sadd.s32 0, 0
      %s28 = smul.u32 8, %s27
      %s30 = ssub.s32 256, 256
      %31 = vsyncadd [#allocation5], %s30
      %s32 = smul.addr %s28, 32
      %s33 = scalar_lea.hbm %s1, %s32
      %s35 = sshll.u32 [#allocation4], 4
      %s36 = int_to_ptr.vmem [resolvable:$true] %s35
      %38 = dma.hbm_to_vmem [thread:$0]  %s33, 256, %s36, [#allocation5]
    $region9: #{tpu_custom_call.1} parent=1 // pred_fallthru
      _
    // Predicated region
    $region10: #{tpu_custom_call.1} parent=1 // pred_check
      _
    $region11: #{tpu_custom_call.1} parent=1 // pred_check_branch
      %40 = sbr.rel (0) target = $region13
    $region12: #{tpu_custom_call.1} parent=1 // pred_region
      %41 = dma.done [#allocation3], 256
    $region13: #{tpu_custom_call.1} parent=1 // pred_fallthru
      _
    // Predicated region
    $region14: #{tpu_custom_call.1} parent=1 // pred_check
      _
    $region15: #{tpu_custom_call.1} parent=1 // pred_check_branch
      %43 = sbr.rel (0) target = $region17
    $region16: #{tpu_custom_call.1} parent=1 // pred_region
      %44 = dma.done [#allocation5], 256
    $region17: #{tpu_custom_call.1} parent=1 // pred_fallthru
      _
    %s45 = sadd.s32 0, 0
    %s46 = smul.u32 8, %s45
    %s47 = sadd.s32 0, 0
    %s48 = smul.u32 8, %s47
    %p49 = scmp.eq.s32.totalorder 0, 0
    // Predicated region
    $region18: #{tpu_custom_call.1} parent=1 // pred_check
      %p50 = pneg %p49
    $region19: #{tpu_custom_call.1} parent=1 // pred_check_branch
      %52 = sbr.rel (%p50) target = $region21
    $region20: #{tpu_custom_call.1} parent=1 // pred_region
      %vm53 = vcmask 1024
      %54 = vst.msk [vmem:[%s2] sm:$0x3] %vm53, 0.0
      %55 = vst.msk [vmem:[%s3] sm:$0x3] %vm53, 0.0
    $region21: #{tpu_custom_call.1} parent=1 // pred_fallthru
      _
    %v56 = vld [vmem:[#allocation2] sm:$0xff]
    %v57 = vld [vmem:[#allocation2 + $0x8] sm:$0xff]
    %v58 = vld [vmem:[#allocation4] sm:$0xff]
    %v59 = vld [vmem:[#allocation4 + $0x8] sm:$0xff]
    %v60 = vld [vmem:[%s2] sm:$0x3]
    %v61 = vmul.f32 %v56, %v58
    %v62 = vmul.f32 %v57, %v59
    %v65 = vcombine.high %v61, %v61
    %v67 = vunpack.c.l.s4 1983009808
    %v68 = vunpack.c.0.s8 %v67
    %v69 = vlaneseq
    %v70 = vshrl.u32 %v69, 7
    %v71 = vsub.s32 %v68, %v70
    %v72 = vrot.slane %v61, %v71
    %v74 = vunpack.c.l.s4 1983009808
    %v75 = vunpack.c.0.s8 %v74
    %v76 = vlaneseq
    %v77 = vshrl.u32 %v76, 7
    %v78 = vsub.s32 %v75, %v77
    %v79 = vrot.slane %v65, %v78
    %v80 = vcombine.high %v72, %v72
    %v81 = vcombine.high %v79, %v79
    %v82 = vcombine.high %v62, %v62
    %v84 = vunpack.c.l.s4 1983009808
    %v85 = vunpack.c.0.s8 %v84
    %v86 = vlaneseq
    %v87 = vshrl.u32 %v86, 7
    %v88 = vsub.s32 %v85, %v87
    %v89 = vrot.slane %v62, %v88
    %v91 = vunpack.c.l.s4 1983009808
    %v92 = vunpack.c.0.s8 %v91
    %v93 = vlaneseq
    %v94 = vshrl.u32 %v93, 7
    %v95 = vsub.s32 %v92, %v94
    %v96 = vrot.slane %v82, %v95
    %v97 = vcombine.high %v89, %v89
    %v98 = vcombine.high %v96, %v96
    %vm107 = vcmask 1041408
    %v108 = vsel %vm107, %v72, 0.0
    %v109 = vsel %vm107, %v80, 0.0
    %v110 = vadd.f32 %v108, %v109
    %v111 = vsel %vm107, %v79, 0.0
    %v112 = vadd.f32 %v110, %v111
    %v113 = vsel %vm107, %v81, 0.0
    %v114 = vadd.f32 %v112, %v113
    %v115 = vsel %vm107, %v89, 0.0
    %v116 = vadd.f32 %v114, %v115
    %v117 = vsel %vm107, %v97, 0.0
    %v118 = vadd.f32 %v116, %v117
    %v119 = vsel %vm107, %v96, 0.0
    %v120 = vadd.f32 %v118, %v119
    %v121 = vsel %vm107, %v98, 0.0
    %v122 = vadd.f32 %v120, %v121
    %123 = vadd.xlane.f32.xlu0 %v122
    %v124 = vpop.xlane.xlu0 %123
    %v125 = vadd.f32 %v60, %v124
    %vm126 = vcmask 1024
    %127 = vst.msk [vmem:[%s2] sm:$0x3] %vm126, %v125
    %v128 = vld [vmem:[%s3] sm:$0x3]
    %v129 = vmul.f32 %v58, 0.25
    %v130 = vmul.f32 %v59, 0.25
    %v131 = vadd.f32 %v56, %v129
    %v132 = vadd.f32 %v57, %v130
    %v135 = vcombine.high %v131, %v131
    %v137 = vunpack.c.l.s4 1983009808
    %v138 = vunpack.c.0.s8 %v137
    %v139 = vlaneseq
    %v140 = vshrl.u32 %v139, 7
    %v141 = vsub.s32 %v138, %v140
    %v142 = vrot.slane %v131, %v141
    %v144 = vunpack.c.l.s4 1983009808
    %v145 = vunpack.c.0.s8 %v144
    %v146 = vlaneseq
    %v147 = vshrl.u32 %v146, 7
    %v148 = vsub.s32 %v145, %v147
    %v149 = vrot.slane %v135, %v148
    %v150 = vcombine.high %v142, %v142
    %v151 = vcombine.high %v149, %v149
    %v152 = vcombine.high %v132, %v132
    %v154 = vunpack.c.l.s4 1983009808
    %v155 = vunpack.c.0.s8 %v154
    %v156 = vlaneseq
    %v157 = vshrl.u32 %v156, 7
    %v158 = vsub.s32 %v155, %v157
    %v159 = vrot.slane %v132, %v158
    %v161 = vunpack.c.l.s4 1983009808
    %v162 = vunpack.c.0.s8 %v161
    %v163 = vlaneseq
    %v164 = vshrl.u32 %v163, 7
    %v165 = vsub.s32 %v162, %v164
    %v166 = vrot.slane %v152, %v165
    %v167 = vcombine.high %v159, %v159
    %v168 = vcombine.high %v166, %v166
    %v177 = vsel %vm107, %v142, 0.0
    %v178 = vsel %vm107, %v150, 0.0
    %v179 = vadd.f32 %v177, %v178
    %v180 = vsel %vm107, %v149, 0.0
    %v181 = vadd.f32 %v179, %v180
    %v182 = vsel %vm107, %v151, 0.0
    %v183 = vadd.f32 %v181, %v182
    %v184 = vsel %vm107, %v159, 0.0
    %v185 = vadd.f32 %v183, %v184
    %v186 = vsel %vm107, %v167, 0.0
    %v187 = vadd.f32 %v185, %v186
    %v188 = vsel %vm107, %v166, 0.0
    %v189 = vadd.f32 %v187, %v188
    %v190 = vsel %vm107, %v168, 0.0
    %v191 = vadd.f32 %v189, %v190
    %192 = vadd.xlane.f32.xlu0 %v191
    %v193 = vpop.xlane.xlu0 %192
    %v194 = vadd.f32 %v128, %v193
    %195 = vst.msk [vmem:[%s3] sm:$0x3] %vm126, %v194
    // Predicated region
    $region22: #{tpu_custom_call.1} parent=1 // pred_check
      _
    $region23: #{tpu_custom_call.1} parent=1 // pred_check_branch
      %197 = sbr.rel (0) target = $region25
    $region24: #{tpu_custom_call.1} parent=1 // pred_region
      _
    $region25: #{tpu_custom_call.1} parent=1 // pred_fallthru
      _
    // Predicated region
    $region26: #{tpu_custom_call.1} parent=1 // pred_check
      _
    $region27: #{tpu_custom_call.1} parent=1 // pred_check_branch
      %199 = sbr.rel (0) target = $region29
    $region28: #{tpu_custom_call.1} parent=1 // pred_region
      _
    $region29: #{tpu_custom_call.1} parent=1 // pred_fallthru
      _
    // Predicated region
    $region30: #{tpu_custom_call.1} parent=1 // pred_check
      _
    $region31: #{tpu_custom_call.1} parent=1 // pred_check_branch
      %201 = sbr.rel (0) target = $region33
    $region32: #{tpu_custom_call.1} parent=1 // pred_region
      _
    $region33: #{tpu_custom_call.1} parent=1 // pred_fallthru
      _
    // Predicated region
    $region34: #{tpu_custom_call.1} parent=1 // pred_check
      _
    $region35: #{tpu_custom_call.1} parent=1 // pred_check_branch
      %203 = sbr.rel (0) target = $region37
    $region36: #{tpu_custom_call.1} parent=1 // pred_region
      _
    $region37: #{tpu_custom_call.1} parent=1 // pred_fallthru
      _
    %204 = vsyncpa [#allocation3], 1
    %205 = vsyncpa [#allocation5], 1

</llo_original>
